<compile_context>
chip_gen: v5e
topology: v5e:2x2
jax: 0.10.0
libtpu: 0.0.40
codegen_flags: <defaults>
</compile_context>

<pallas_src>
import functools

import jax
import jax.numpy as jnp
from jax.experimental import pallas as pl
from jax.experimental.pallas import tpu as pltpu

_LANES = 128
_MIN_GRID_STEPS = 8          # >= ~4 x TensorCores (2 on v7x) for megacore + pipelining


def _ceil_div(a, b):
    return -(-a // b)


def _vmem_budget():
    """(per-input-block byte budget, scoped vmem_limit_bytes) per chip generation."""
    try:
        cap = int(pltpu.get_tpu_info().vmem_capacity_bytes)
    except Exception:
        cap = 0
    if cap >= 128 * 1024 * 1024:                    # v5e / v6e: 128 MiB VMEM
        return 4 * 1024 * 1024, 64 * 1024 * 1024
    # v7x (64 MiB per TensorCore) or unknown: stay conservative so the f32
    # in-kernel temporaries + double buffering never spill or OOM.
    return 2 * 1024 * 1024, 48 * 1024 * 1024


def _layernorm_kernel(x_ref, gb_ref, o_ref, *, eps, bf16_affine):
    # x_ref : (1, C, TR, 128)  [aligned path]   or  (1, C, TM)  [ragged path]
    # gb_ref: (2, C, 1, 1)                      or  (2, C, 1)   -- f32; row0=g, row1=b
    x = x_ref[...].astype(jnp.float32)
    # Channel reduction over axis 1: a slab axis in the 4-D layout (pure VPU
    # adds, no sublane padding) and the sublane axis in the 3-D fallback
    # (XLU reduce -- separate issue slot, still HBM-bound overall).
    mean = jnp.mean(x, axis=1, keepdims=True)
    xc = x - mean
    var = jnp.mean(xc * xc, axis=1, keepdims=True)          # unbiased=False
    inv = jax.lax.rsqrt(var + eps)                           # EUP rsqrt
    xn = xc * inv
    gb = gb_ref[...]
    g = gb[0:1]
    b = gb[1:2]
    if bf16_affine:
        # bf16 VALU epilogue (helps v6e/v7x; harmless on v5e where bf16 is
        # promoted internally).  Stats above stayed in f32.
        out = (xn.astype(jnp.bfloat16) * g.astype(jnp.bfloat16)
               + b.astype(jnp.bfloat16))
    else:
        out = xn * g + b
    o_ref[...] = out.astype(o_ref.dtype)


def _pick_rows(mr, c, itemsize, n_batch, budget_bytes):
    """Rows-of-128-lanes per block along the MR axis (aligned 4-D path)."""
    align = max(8, 32 // max(1, itemsize))          # 8 f32 / 16 bf16 / 32 int8
    if mr <= align:
        return mr                                   # full-dim block: always legal
    max_rows = max(align, budget_bytes // (c * _LANES * itemsize))
    # Keep enough grid steps for megacore sharding + double-buffer overlap.
    want_m_steps = _ceil_div(_MIN_GRID_STEPS, max(1, n_batch))
    max_rows = min(max_rows, max(align, _ceil_div(mr, want_m_steps)), mr)
    r0 = max(align, (max_rows // align) * align)
    r = r0
    while r >= align:                               # prefer a divisor: no ragged tail
        if mr % r == 0:
            return r
        r -= align
    return r0                                       # ragged MR tail -> masked edge block


def _pick_cols(m, c, itemsize, n_batch, budget_bytes):
    """Lane width per block along the flattened spatial axis (ragged 3-D path)."""
    if m <= _LANES:
        return m                                    # full-dim block: always legal
    max_cols = max(_LANES, budget_bytes // (c * itemsize))
    want_m_steps = _ceil_div(_MIN_GRID_STEPS, max(1, n_batch))
    max_cols = min(max_cols, max(_LANES, _ceil_div(m, want_m_steps)), m)
    return max(_LANES, (max_cols // _LANES) * _LANES)


def layernorm_nchw5d(x, g, b, eps=1e-5, *, block_rows=None, block_cols=None):
    """Channel-wise LayerNorm.  x: (N, C, D, H, W); g, b: (1, C, 1, 1, 1)."""
    N, C, D, H, W = x.shape
    M = D * H * W
    itemsize = jnp.dtype(x.dtype).itemsize
    budget, vmem_limit = _vmem_budget()
    bf16_affine = (x.dtype == jnp.bfloat16)

    # gamma/beta stacked into one small f32 input -> single BlockSpec / buffer.
    gb = jnp.concatenate([g.reshape(1, C), b.reshape(1, C)],
                         axis=0).astype(jnp.float32)

    cost = pl.CostEstimate(
        flops=9 * N * C * M,
        transcendentals=N * M,
        bytes_accessed=2 * N * C * M * itemsize,
    )
    kernel = functools.partial(_layernorm_kernel, eps=eps, bf16_affine=bf16_affine)
    cparams = pltpu.CompilerParams(
        dimension_semantics=("parallel", "parallel"),
        vmem_limit_bytes=vmem_limit,
    )

    if M % _LANES == 0:
        # Aligned path: spatial fills (sublane, lane); channels are slab dims.
        MR = M // _LANES
        tr = block_rows if block_rows is not None else _pick_rows(
            MR, C, itemsize, N, budget)
        x4 = x.reshape(N, C, MR, _LANES)                  # free reshape
        gb4 = gb.reshape(2, C, 1, 1)
        out = pl.pallas_call(
            kernel,
            out_shape=jax.ShapeDtypeStruct((N, C, MR, _LANES), x.dtype),
            grid_spec=pltpu.PrefetchScalarGridSpec(
                num_scalar_prefetch=0,
                grid=(N, pl.cdiv(MR, tr)),
                in_specs=[
                    # NOTE: if xprof ever shows exposed DMA, sweep
                    # pipeline_mode=pl.Buffered(3) here (VMEM permitting).
                    pl.BlockSpec((1, C, tr, _LANES), lambda n, m: (n, 0, m, 0)),
                    pl.BlockSpec((2, C, 1, 1), lambda n, m: (0, 0, 0, 0)),
                ],
                out_specs=pl.BlockSpec((1, C, tr, _LANES),
                                       lambda n, m: (n, 0, m, 0)),
            ),
            compiler_params=cparams,
            cost_estimate=cost,
        )(x4, gb4)
        return out.reshape(N, C, D, H, W)

    # Ragged spatial size: NO wrapper pad/slice (that tripled HBM traffic).
    # Stream (1, C, tm) blocks with tm a multiple of 128 (or the full M when
    # M < 128); the edge block's OOB lanes never mix with valid lanes because
    # the reduction is over C only, and OOB writes are dropped by Pallas.
    tm = block_cols if block_cols is not None else _pick_cols(
        M, C, itemsize, N, budget)
    x3 = x.reshape(N, C, M)                               # free reshape
    gb3 = gb.reshape(2, C, 1)
    out = pl.pallas_call(
        kernel,
        out_shape=jax.ShapeDtypeStruct((N, C, M), x.dtype),
        grid_spec=pltpu.PrefetchScalarGridSpec(
            num_scalar_prefetch=0,
            grid=(N, pl.cdiv(M, tm)),
            in_specs=[
                pl.BlockSpec((1, C, tm), lambda n, m: (n, 0, m)),
                pl.BlockSpec((2, C, 1), lambda n, m: (0, 0, 0)),
            ],
            out_specs=pl.BlockSpec((1, C, tm), lambda n, m: (n, 0, m)),
        ),
        compiler_params=cparams,
        cost_estimate=cost,
    )(x3, gb3)
    return out.reshape(N, C, D, H, W)


def layernorm_reference(x, g, b, eps=1e-5):
    mean = jnp.mean(x, axis=1, keepdims=True)
    var = jnp.mean((x - mean) ** 2, axis=1, keepdims=True)   # unbiased=False
    return (x - mean) / jnp.sqrt(var + eps) * g + b


if __name__ == "__main__":
    key = jax.random.PRNGKey(0)
    k1, k2, k3, k4 = jax.random.split(key, 4)

    # Case 1: aligned spatial (D*H*W % 128 == 0), f32, default affine.
    N, C, D, H, W = 2, 4, 4, 8, 8                         # M = 256 -> MR = 2
    x1 = jax.random.normal(k1, (N, C, D, H, W), dtype=jnp.float32)
    g1 = jnp.ones((1, C, 1, 1, 1), dtype=jnp.float32)
    b1 = jnp.zeros((1, C, 1, 1, 1), dtype=jnp.float32)
    y1 = jax.block_until_ready(layernorm_nchw5d(x1, g1, b1, eps=1e-5))
    assert jnp.allclose(y1, layernorm_reference(x1, g1, b1, eps=1e-5),
                        atol=1e-5, rtol=1e-5), "mismatch (case 1: aligned)"

    # Case 2: ragged spatial (M = 105, not a multiple of 128) -> 3-D no-pad path.
    N2, C2, D2, H2, W2 = 1, 6, 3, 5, 7
    x2 = jax.random.normal(k2, (N2, C2, D2, H2, W2), dtype=jnp.float32)
    g2 = 1.0 + 0.1 * jnp.arange(C2, dtype=jnp.float32).reshape(1, C2, 1, 1, 1)
    b2 = 0.05 * jnp.arange(C2, dtype=jnp.float32).reshape(1, C2, 1, 1, 1)
    y2 = jax.block_until_ready(layernorm_nchw5d(x2, g2, b2, eps=1e-5))
    assert jnp.allclose(y2, layernorm_reference(x2, g2, b2, eps=1e-5),
                        atol=1e-5, rtol=1e-5), "mismatch (case 2: ragged M)"

    # Case 3: aligned M but MR % block_rows != 0 -> partial edge block on the
    # row axis of the 4-D path (MR = 10, block_rows = 8).
    N3, C3, D3, H3, W3 = 1, 8, 5, 16, 16                  # M = 1280 -> MR = 10
    x3 = jax.random.normal(k3, (N3, C3, D3, H3, W3), dtype=jnp.float32)
    g3 = 1.0 - 0.05 * jnp.arange(C3, dtype=jnp.float32).reshape(1, C3, 1, 1, 1)
    b3 = 0.1 * jnp.arange(C3, dtype=jnp.float32).reshape(1, C3, 1, 1, 1)
    y3 = jax.block_until_ready(
        layernorm_nchw5d(x3, g3, b3, eps=1e-5, block_rows=8))
    assert jnp.allclose(y3, layernorm_reference(x3, g3, b3, eps=1e-5),
                        atol=1e-5, rtol=1e-5), "mismatch (case 3: ragged MR tile)"

    # Case 4: bf16 I/O (bf16 affine epilogue, f32 stats), aligned path.
    N4, C4, D4, H4, W4 = 2, 8, 2, 8, 128                  # M = 2048 -> MR = 16
    x4 = jax.random.normal(
        k4, (N4, C4, D4, H4, W4), dtype=jnp.float32).astype(jnp.bfloat16)
    g4 = (1.0 + 0.1 * jnp.arange(C4, dtype=jnp.float32)
          ).reshape(1, C4, 1, 1, 1).astype(jnp.bfloat16)
    b4 = (0.05 * jnp.arange(C4, dtype=jnp.float32)
          ).reshape(1, C4, 1, 1, 1).astype(jnp.bfloat16)
    y4 = jax.block_until_ready(layernorm_nchw5d(x4, g4, b4, eps=1e-5))
    ref4 = layernorm_reference(x4.astype(jnp.float32), g4.astype(jnp.float32),
                               b4.astype(jnp.float32), eps=1e-5)
    assert jnp.allclose(y4.astype(jnp.float32), ref4,
                        atol=5e-2, rtol=5e-2), "mismatch (case 4: bf16)"

    print("KERNEL_OK")
</pallas_src>

<mosaic_0001>
module attributes {stable_mosaic.version = 11 : i64} {
  func.func @_layernorm_kernel(%arg0: i32, %arg1: i32, %arg2: memref<1x4x2x128xf32, #tpu.memory_space<vmem>>, %arg3: memref<2x4x1x1xf32, #tpu.memory_space<vmem>>, %arg4: memref<1x4x2x128xf32, #tpu.memory_space<vmem>>) attributes {dimension_semantics = [#tpu.dimension_semantics<parallel>, #tpu.dimension_semantics<parallel>], iteration_bounds = array<i64: 2, 1>, scalar_prefetch = 0 : i64, scratch_operands = 0 : i64, tpu.core_type = #tpu.core_type<tc>, window_params = [{transform_indices = @transform_0, window_bounds = array<i64: 1, 4, 2, 128>}, {pipeline_mode = #tpu.pipeline_mode<synchronous>, transform_indices = @transform_1, window_bounds = array<i64: 2, 4, 1, 1>}, {transform_indices = @transform_2, window_bounds = array<i64: 1, 4, 2, 128>}]} {
    %c0 = arith.constant 0 : index
    %c0_0 = arith.constant 0 : index
    %c0_1 = arith.constant 0 : index
    %c0_2 = arith.constant 0 : index
    %0 = vector.load %arg2[%c0, %c0_0, %c0_1, %c0_2] : memref<1x4x2x128xf32, #tpu.memory_space<vmem>>, vector<1x4x2x128xf32>
    %cst = arith.constant dense<0.000000e+00> : vector<1x2x128xf32>
    %1 = vector.multi_reduction <add>, %0, %cst [1] : vector<1x4x2x128xf32> to vector<1x2x128xf32>
    %2 = vector.shape_cast %1 : vector<1x2x128xf32> to vector<1x1x2x128xf32>
    %cst_3 = arith.constant 4.000000e+00 : f32
    %3 = vector.broadcast %cst_3 : f32 to vector<1x1x2x128xf32>
    %4 = arith.divf %2, %3 : vector<1x1x2x128xf32>
    %5 = vector.broadcast %4 : vector<1x1x2x128xf32> to vector<1x4x2x128xf32>
    %6 = arith.subf %0, %5 : vector<1x4x2x128xf32>
    %7 = arith.mulf %6, %6 : vector<1x4x2x128xf32>
    %cst_4 = arith.constant dense<0.000000e+00> : vector<1x2x128xf32>
    %8 = vector.multi_reduction <add>, %7, %cst_4 [1] : vector<1x4x2x128xf32> to vector<1x2x128xf32>
    %9 = vector.shape_cast %8 : vector<1x2x128xf32> to vector<1x1x2x128xf32>
    %cst_5 = arith.constant 4.000000e+00 : f32
    %10 = vector.broadcast %cst_5 : f32 to vector<1x1x2x128xf32>
    %11 = arith.divf %9, %10 : vector<1x1x2x128xf32>
    %cst_6 = arith.constant 9.99999974E-6 : f32
    %12 = vector.broadcast %cst_6 : f32 to vector<1x1x2x128xf32>
    %13 = arith.addf %11, %12 : vector<1x1x2x128xf32>
    %14 = math.rsqrt %13 : vector<1x1x2x128xf32>
    %15 = vector.broadcast %14 : vector<1x1x2x128xf32> to vector<1x4x2x128xf32>
    %16 = arith.mulf %6, %15 : vector<1x4x2x128xf32>
    %c0_7 = arith.constant 0 : index
    %c0_8 = arith.constant 0 : index
    %c0_9 = arith.constant 0 : index
    %c0_10 = arith.constant 0 : index
    %17 = vector.load %arg3[%c0_7, %c0_8, %c0_9, %c0_10] : memref<2x4x1x1xf32, #tpu.memory_space<vmem>>, vector<2x4x1x1xf32>
    %18 = vector.extract_strided_slice %17 {offsets = [0, 0, 0, 0], sizes = [1, 4, 1, 1], strides = [1, 1, 1, 1]} : vector<2x4x1x1xf32> to vector<1x4x1x1xf32>
    %19 = vector.extract_strided_slice %17 {offsets = [1, 0, 0, 0], sizes = [1, 4, 1, 1], strides = [1, 1, 1, 1]} : vector<2x4x1x1xf32> to vector<1x4x1x1xf32>
    %20 = vector.broadcast %18 : vector<1x4x1x1xf32> to vector<1x4x2x128xf32>
    %21 = arith.mulf %16, %20 : vector<1x4x2x128xf32>
    %22 = vector.broadcast %19 : vector<1x4x1x1xf32> to vector<1x4x2x128xf32>
    %23 = arith.addf %21, %22 : vector<1x4x2x128xf32>
    %c0_11 = arith.constant 0 : index
    %c0_12 = arith.constant 0 : index
    %c0_13 = arith.constant 0 : index
    %c0_14 = arith.constant 0 : index
    %24 = vector.load %arg4[%c0_11, %c0_12, %c0_13, %c0_14] : memref<1x4x2x128xf32, #tpu.memory_space<vmem>>, vector<1x4x2x128xf32>
    tpu.vector_store %arg4[%c0_11, %c0_12, %c0_13, %c0_14], %23 {strides = array<i32>} : memref<1x4x2x128xf32, #tpu.memory_space<vmem>>, vector<1x4x2x128xf32>,
    return
  }
  func.func @transform_0(%arg0: i32, %arg1: i32) -> (i32, i32, i32, i32) {
    %c0_i32 = arith.constant 0 : i32
    %c0_i32_0 = arith.constant 0 : i32
    %c0_i32_1 = arith.constant 0 : i32
    return %arg0, %c0_i32, %arg1, %c0_i32_0 : i32, i32, i32, i32
  }
  func.func @transform_1(%arg0: i32, %arg1: i32) -> (i32, i32, i32, i32) {
    %c0_i32 = arith.constant 0 : i32
    %c0_i32_0 = arith.constant 0 : i32
    %c0_i32_1 = arith.constant 0 : i32
    %c0_i32_2 = arith.constant 0 : i32
    %c0_i32_3 = arith.constant 0 : i32
    return %c0_i32, %c0_i32_0, %c0_i32_1, %c0_i32_2 : i32, i32, i32, i32
  }
  func.func @transform_2(%arg0: i32, %arg1: i32) -> (i32, i32, i32, i32) {
    %c0_i32 = arith.constant 0 : i32
    %c0_i32_0 = arith.constant 0 : i32
    %c0_i32_1 = arith.constant 0 : i32
    return %arg0, %c0_i32, %arg1, %c0_i32_0 : i32, i32, i32, i32
  }
}

</mosaic_0001>

<llo_original>
// kernel: tpu_custom_call.1
$region0: #{tpu_custom_call.1}
  #allocation0 [shape = 'u32[]', space=smem, size = 0x4, offset = 0x4, fixed_abs, tag = 'smem constant byte address 0x4 - core index']
  #allocation1 [shape = 'u32[72,128]{1,0:T(1,128)}', space=vmem, size = 0x9000, scoped, tag = 'internal scratch']
  %s0 = inlined_call_operand.hbm [shape: f32[2,4,2,128], index: 0, kind: input, shape index: {}]
  %s1 = inlined_call_operand.vmem [shape: f32[2,4,1,1], index: 1, kind: input, shape index: {}]
  %s2 = inlined_call_operand.hbm [shape: f32[2,4,2,128], index: 2, kind: output, shape index: {}]
  %s3 = sld [smem:[#allocation0]]
  $region45: #{tpu_custom_call.1} parent=0
    _
  %s5 = ssub.s32 1, %s3
  %s6 = scalar_select 0, %s5, %s3
  $region1: #{tpu_custom_call.1} parent=0
    #allocation2 [shape = 'u8[8192]{0}', space=vmem, size = 0x2000, scoped, tag = 'input window, operand 0']
    #allocation3 [shape = 's32[2]{0}', space=sflag, size = 0x8, scoped, tag = 'scoped memory for tpu_custom_call.1']
    #allocation4 [shape = 's32[2]{0}', space=sflag, size = 0x8, scoped, tag = 'scoped memory for tpu_custom_call.1']
    #allocation5 [shape = 'u8[8192]{0}', space=vmem, size = 0x2000, scoped, tag = 'output window, operand 0']
    %7 = vsyncpa [#allocation3], 0
    %s8 = scalar_lea.sflag [#allocation3], 1
    %9 = vsyncpa %s8, 0
    %10 = vsyncpa [#allocation4], 0
    %s11 = scalar_lea.sflag [#allocation4], 1
    %12 = vsyncpa %s11, 0
    loop: start=0, step=1, limit=4
    $region2: #{tpu_custom_call.1} parent=1 // loop_pre_header
      _
    $region3: #{tpu_custom_call.1} parent=1 // loop_header
      %s14 = sphi 0, %s18
      %p15 = scmp.ge.s32.totalorder %s14, 4
      %s21 = sphi 0, %s33
      %s22 = sphi 0, %s29
      %s23 = sphi 0, %s21
      %s24 = sphi 0, %s22
      %s25 = sphi 0, %s23
      %s26 = sphi 0, %s24
      %s38 = sphi 0, %s40
      %s41 = sphi 0, %s38
      %s42 = sphi 0, %s41
      %s58 = sphi 0, %s42
      %s62 = sphi 0, %s62
      %s64 = sphi 0, %s62
      %s65 = sphi 0, %s64
      %s79 = sphi 0, %s65
      %s87 = sphi 0, %s89
      %s90 = sphi 0, %s87
      %s91 = sphi 0, %s90
      %s107 = sphi 0, %s91
    $region4: #{tpu_custom_call.1} parent=1 // loop_header_branch
      %17 = sbr.rel (%p15) target = $region8
    $region5: #{tpu_custom_call.1} parent=1 // loop_body
      %s19 = ssub.s32 %s14, 1
      %s20 = ssub.s32 %s14, 2
      %s27 = sadd.s32 1, %s22
      %p28 = scmp.ge.s32.totalorder %s27, 1
      %s29 = scalar_select %p28, 0, %s27
      %s30 = sadd.s32 1, %s21
      %s31 = scalar_select %p28, %s30, %s21
      %p32 = scmp.ge.s32.totalorder %s31, 2
      %s33 = scalar_select %p32, 0, %s31
      %s34 = ssub.s32 %s21, %s33
      %s35 = ssub.s32 %s22, %s29
      %s36 = sor.u32 %s34, %s35
      %p37 = scmp.eq.s32.totalorder %s36, 0
      %s39 = sadd.s32 %s38, 1
      %s40 = scalar_select %p37, %s38, %s39
      %p43 = pneg %p37
      %p44 = scmp.eq.s32.totalorder %s14, 1
      %p45 = por %p43, %p44
      %p46 = scmp.ne.s32.totalorder %s38, %s41
      %p47 = scmp.eq.s32.totalorder %s14, 0
      %p48 = por %p46, %p47
      %p49 = scmp.ne.s32.totalorder %s38, %s41
      %p50 = scmp.eq.s32.totalorder %s19, 1
      %p51 = por %p49, %p50
      %p52 = scmp.ne.s32.totalorder %s41, %s42
      %p53 = scmp.eq.s32.totalorder %s19, 0
      %p54 = por %p52, %p53
      %p55 = scmp.ne.s32.totalorder %s41, %s42
      %p56 = scmp.eq.s32.totalorder %s20, 1
      %p57 = por %p55, %p56
      %p59 = scmp.ne.s32.totalorder %s42, %s58
      %p60 = scmp.eq.s32.totalorder %s20, 0
      %p61 = por %p59, %p60
      %s63 = sadd.s32 %s62, 1
      %p66 = scmp.eq.s32.totalorder %s14, 1
      %p67 = scmp.ne.s32.totalorder %s62, %s64
      %p68 = scmp.eq.s32.totalorder %s14, 0
      %p69 = por %p67, %p68
      %p70 = scmp.ne.s32.totalorder %s62, %s64
      %p71 = scmp.eq.s32.totalorder %s19, 1
      %p72 = por %p70, %p71
      %p73 = scmp.ne.s32.totalorder %s64, %s65
      %p74 = scmp.eq.s32.totalorder %s19, 0
      %p75 = por %p73, %p74
      %p76 = scmp.ne.s32.totalorder %s64, %s65
      %p77 = scmp.eq.s32.totalorder %s20, 1
      %p78 = por %p76, %p77
      %p80 = scmp.ne.s32.totalorder %s65, %s79
      %p81 = scmp.eq.s32.totalorder %s20, 0
      %p82 = por %p80, %p81
      %s83 = ssub.s32 %s21, %s33
      %s84 = ssub.s32 %s22, %s29
      %s85 = sor.u32 %s83, %s84
      %p86 = scmp.eq.s32.totalorder %s85, 0
      %s88 = sadd.s32 %s87, 1
      %s89 = scalar_select %p86, %s87, %s88
      %p92 = pneg %p86
      %p93 = scmp.eq.s32.totalorder %s14, 1
      %p94 = por %p92, %p93
      %p95 = scmp.ne.s32.totalorder %s87, %s90
      %p96 = scmp.eq.s32.totalorder %s14, 0
      %p97 = por %p95, %p96
      %p98 = scmp.ne.s32.totalorder %s87, %s90
      %p99 = scmp.eq.s32.totalorder %s19, 1
      %p100 = por %p98, %p99
      %p101 = scmp.ne.s32.totalorder %s90, %s91
      %p102 = scmp.eq.s32.totalorder %s19, 0
      %p103 = por %p101, %p102
      %p104 = scmp.ne.s32.totalorder %s90, %s91
      %p105 = scmp.eq.s32.totalorder %s20, 1
      %p106 = por %p104, %p105
      %p108 = scmp.ne.s32.totalorder %s91, %s107
      %p109 = scmp.eq.s32.totalorder %s20, 0
      %p110 = por %p108, %p109
      %p111 = scmp.le.s32.totalorder 1, %s14
      %p112 = scmp.lt.s32.totalorder %s14, 3
      %p113 = pnand %p111, %p112
      %p114 = pneg %p113
      // Predicated region
      $region9: #{tpu_custom_call.1} parent=5 // pred_check
        _
      $region10: #{tpu_custom_call.1} parent=5 // pred_check_branch
        %116 = sbr.rel (%p113) target = $region12
      $region11: #{tpu_custom_call.1} parent=5 // pred_region
        %s117 = ssub.s32 %s14, 1
        // Predicated region
        $region13: #{tpu_custom_call.1} parent=11 // pred_check
          %p118 = pneg %p75
        $region14: #{tpu_custom_call.1} parent=11 // pred_check_branch
          %120 = sbr.rel (%p118) target = $region16
        $region15: #{tpu_custom_call.1} parent=11 // pred_region
          _
        $region16: #{tpu_custom_call.1} parent=11 // pred_fallthru
          _
      $region12: #{tpu_custom_call.1} parent=5 // pred_fallthru
        _
      %p121 = scmp.lt.s32.totalorder %s14, 2
      // Predicated region
      $region17: #{tpu_custom_call.1} parent=5 // pred_check
        %p122 = pneg %p121
      $region18: #{tpu_custom_call.1} parent=5 // pred_check_branch
        %124 = sbr.rel (%p122) target = $region20
      $region19: #{tpu_custom_call.1} parent=5 // pred_region
        // Predicated region
        $region21: #{tpu_custom_call.1} parent=19 // pred_check
          %p125 = pneg %p48
        $region22: #{tpu_custom_call.1} parent=19 // pred_check_branch
          %127 = sbr.rel (%p125) target = $region24
        $region23: #{tpu_custom_call.1} parent=19 // pred_region
          %s128 = sand.u32 %s38, 1
          %s129 = scalar_lea.sflag [#allocation3], %s128
          %s130 = sand.u32 %s38, 1
          %s131 = smul.addr %s130, 8
          %s132 = scalar_lea.vmem [#allocation2], %s131
          %134 = vsyncadd %s129, 0
          %s135 = smul.addr %s21, 4
          %s136 = sadd.s32 %s22, %s135
          %s137 = smul.addr %s136, 2
          %s138 = scalar_lea.hbm %s0, %s137
          %s139 = sshll.u32 %s138, 4
          %s140 = int_to_ptr.hbm [resolvable:$true] %s139
          %s141 = sshll.u32 %s132, 4
          %s142 = int_to_ptr.vmem [resolvable:$true] %s141
          %147 = dma.hbm_to_vmem [thread:$0]  %s140, 128, %s142, %s129, 32, 32, 2
        $region24: #{tpu_custom_call.1} parent=19 // pred_fallthru
          _
      $region20: #{tpu_custom_call.1} parent=5 // pred_fallthru
        _
      %p148 = scmp.le.s32.totalorder 1, %s14
      %p149 = scmp.lt.s32.totalorder %s14, 3
      %p150 = pnand %p148, %p149
      %p151 = pneg %p150
      // Predicated region
      $region25: #{tpu_custom_call.1} parent=5 // pred_check
        _
      $region26: #{tpu_custom_call.1} parent=5 // pred_check_branch
        %153 = sbr.rel (%p150) target = $region28
      $region27: #{tpu_custom_call.1} parent=5 // pred_region
        %s154 = ssub.s32 %s14, 1
        %s155 = sand.u32 %s41, 1
        %s156 = scalar_lea.sflag [#allocation3], %s155
        %s157 = sand.u32 %s41, 1
        %s158 = smul.addr %s157, 8
        %s159 = scalar_lea.vmem [#allocation2], %s158
        // Predicated region
        $region29: #{tpu_custom_call.1} parent=27 // pred_check
          %p160 = pneg %p54
        $region30: #{tpu_custom_call.1} parent=27 // pred_check_branch
          %162 = sbr.rel (%p160) target = $region32
        $region31: #{tpu_custom_call.1} parent=27 // pred_region
          %164 = dma.done %s156, 128
        $region32: #{tpu_custom_call.1} parent=27 // pred_fallthru
          _
        %s165 = sand.u32 %s41, 1
        %s166 = scalar_lea.sflag [#allocation3], %s165
        %s167 = sand.u32 %s41, 1
        %s168 = smul.addr %s167, 8
        %s169 = scalar_lea.vmem [#allocation2], %s168
        %p170 = pneg %p54
        %p171 = pneg %p51
        %p172 = pneg %p75
        %p173 = pneg %p72
        %p174 = pneg %p103
        %p175 = pneg %p100
        %s176 = sand.u32 %s90, 1
        %s177 = scalar_lea.sflag [#allocation4], %s176
        %s178 = sand.u32 %s90, 1
        %s179 = smul.addr %s178, 8
        %s180 = scalar_lea.vmem [#allocation5], %s179
        %v181 = vld [vmem:[%s159] sm:$0x3]
        %v182 = vld [vmem:[%s159 + $0x2] sm:$0x3]
        %v183 = vld [vmem:[%s159 + $0x4] sm:$0x3]
        %v184 = vld [vmem:[%s159 + $0x6] sm:$0x3]
        %vm185 = vcmask 1041408
        %v186 = vsel %vm185, %v181, 0.0
        %v187 = vsel %vm185, %v182, 0.0
        %v188 = vadd.f32 %v186, %v187
        %v189 = vsel %vm185, %v183, 0.0
        %v190 = vadd.f32 %v188, %v189
        %v191 = vsel %vm185, %v184, 0.0
        %v192 = vadd.f32 %v190, %v191
        %v193 = vrcp.pop 4.0
        %v194 = vmul.f32 4.0, %v193
        %v195 = vsub.f32 1.0, %v194
        %v196 = vmul.f32 %v193, %v195
        %v197 = vadd.f32 %v193, %v196
        %vm198 = vweird.f32 %v193
        %v199 = vsel %vm198, %v193, %v197
        %v200 = vmul.f32 %v192, %v199
        %v201 = vsub.f32 %v181, %v200
        %v202 = vsub.f32 %v182, %v200
        %v203 = vsub.f32 %v183, %v200
        %v204 = vsub.f32 %v184, %v200
        %v205 = vmul.f32 %v201, %v201
        %v206 = vmul.f32 %v202, %v202
        %v207 = vmul.f32 %v203, %v203
        %v208 = vmul.f32 %v204, %v204
        %v209 = vsel %vm185, %v205, 0.0
        %v210 = vsel %vm185, %v206, 0.0
        %v211 = vadd.f32 %v209, %v210
        %v212 = vsel %vm185, %v207, 0.0
        %v213 = vadd.f32 %v211, %v212
        %v214 = vsel %vm185, %v208, 0.0
        %v215 = vadd.f32 %v213, %v214
        %v216 = vmul.f32 %v215, %v199
        %v217 = vadd.f32 %v216, 1e-05
        %v218 = vrsqrt.pop %v217
        %v219 = vmul.f32 %v218, %v217
        %v220 = vmul.f32 %v219, %v218
        %v221 = vmul.f32 0.5, %v220
        %v222 = vsub.f32 1.5, %v221
        %v223 = vmul.f32 %v218, %v222
        %vm224 = vweird.f32 %v217
        %vm225 = vweird.f32 %v218
        %vm226 = vmor %vm224, %vm225
        %v227 = vsel %vm226, %v218, %v223
        %v228 = vmul.f32 %v201, %v227
        %v229 = vmul.f32 %v202, %v227
        %v230 = vmul.f32 %v203, %v227
        %v231 = vmul.f32 %v204, %v227
        %v232 = vld [vmem:[%s1] sm:$0x1]
        %v233 = vld [vmem:[%s1 + $0x1] sm:$0x1]
        %v234 = vld [vmem:[%s1 + $0x2] sm:$0x1]
        %v235 = vld [vmem:[%s1 + $0x3] sm:$0x1]
        %v236 = vld [vmem:[%s1 + $0x4] sm:$0x1]
        %v237 = vld [vmem:[%s1 + $0x5] sm:$0x1]
        %v238 = vld [vmem:[%s1 + $0x6] sm:$0x1]
        %v239 = vld [vmem:[%s1 + $0x7] sm:$0x1]
        %v244 = vperm.slane %v232, 0
        %v245 = vperm.slane %v233, 0
        %v246 = vperm.slane %v234, 0
        %v247 = vperm.slane %v235, 0
        %248 = vset.pattern.permute.xlu0 0
        %249 = vperm.xlu0 %248, %v244
        %v250 = vpop.permute.xlu0 %249
        %252 = vset.pattern.permute.xlu0 0
        %253 = vperm.xlu0 %252, %v245
        %v254 = vpop.permute.xlu0 %253
        %256 = vset.pattern.permute.xlu0 0
        %257 = vperm.xlu0 %256, %v246
        %v258 = vpop.permute.xlu0 %257
        %260 = vset.pattern.permute.xlu0 0
        %261 = vperm.xlu0 %260, %v247
        %v262 = vpop.permute.xlu0 %261
        %v264 = vmul.f32 %v228, %v250
        %v265 = vmul.f32 %v229, %v254
        %v266 = vmul.f32 %v230, %v258
        %v267 = vmul.f32 %v231, %v262
        %v272 = vperm.slane %v236, 0
        %v273 = vperm.slane %v237, 0
        %v274 = vperm.slane %v238, 0
        %v275 = vperm.slane %v239, 0
        %276 = vset.pattern.permute.xlu0 0
        %277 = vperm.xlu0 %276, %v272
        %v278 = vpop.permute.xlu0 %277
        %280 = vset.pattern.permute.xlu0 0
        %281 = vperm.xlu0 %280, %v273
        %v282 = vpop.permute.xlu0 %281
        %284 = vset.pattern.permute.xlu0 0
        %285 = vperm.xlu0 %284, %v274
        %v286 = vpop.permute.xlu0 %285
        %288 = vset.pattern.permute.xlu0 0
        %289 = vperm.xlu0 %288, %v275
        %v290 = vpop.permute.xlu0 %289
        %v292 = vadd.f32 %v264, %v278
        %v293 = vadd.f32 %v265, %v282
        %v294 = vadd.f32 %v266, %v286
        %v295 = vadd.f32 %v267, %v290
        %296 = vst [vmem:[%s180] sm:$0x3] %v292
        %297 = vst [vmem:[%s180 + $0x2] sm:$0x3] %v293
        %298 = vst [vmem:[%s180 + $0x4] sm:$0x3] %v294
        %299 = vst [vmem:[%s180 + $0x6] sm:$0x3] %v295
        %s300 = sand.u32 %s90, 1
        %s301 = scalar_lea.sflag [#allocation4], %s300
        %s302 = sand.u32 %s90, 1
        %s303 = smul.addr %s302, 8
        %s304 = scalar_lea.vmem [#allocation5], %s303
        // Predicated region
        $region33: #{tpu_custom_call.1} parent=27 // pred_check
          %p305 = pneg %p100
        $region34: #{tpu_custom_call.1} parent=27 // pred_check_branch
          %307 = sbr.rel (%p305) target = $region36
        $region35: #{tpu_custom_call.1} parent=27 // pred_region
          %309 = vsyncadd %s301, 0
          %s310 = smul.addr %s23, 4
          %s311 = sadd.s32 %s24, %s310
          %s312 = smul.addr %s311, 2
          %s313 = scalar_lea.hbm %s2, %s312
          %s314 = sshll.u32 %s304, 4
          %s315 = int_to_ptr.vmem [resolvable:$true] %s314
          %s316 = sshll.u32 %s313, 4
          %s317 = int_to_ptr.hbm [resolvable:$true] %s316
          %322 = dma.vmem_to_hbm [thread:$0]  %s315, 128, %s317, %s301, 32, 32, 2
        $region36: #{tpu_custom_call.1} parent=27 // pred_fallthru
          _
      $region28: #{tpu_custom_call.1} parent=5 // pred_fallthru
        _
      %p323 = scmp.le.s32.totalorder 2, %s14
      // Predicated region
      $region37: #{tpu_custom_call.1} parent=5 // pred_check
        %p324 = pneg %p323
      $region38: #{tpu_custom_call.1} parent=5 // pred_check_branch
        %326 = sbr.rel (%p324) target = $region40
      $region39: #{tpu_custom_call.1} parent=5 // pred_region
        %s327 = ssub.s32 %s14, 2
        // Predicated region
        $region41: #{tpu_custom_call.1} parent=39 // pred_check
          %p328 = pneg %p106
        $region42: #{tpu_custom_call.1} parent=39 // pred_check_branch
          %330 = sbr.rel (%p328) target = $region44
        $region43: #{tpu_custom_call.1} parent=39 // pred_region
          %s331 = sand.u32 %s91, 1
          %s332 = scalar_lea.sflag [#allocation4], %s331
          %s333 = sand.u32 %s91, 1
          %s334 = smul.addr %s333, 8
          %s335 = scalar_lea.vmem [#allocation5], %s334
          %337 = dma.done %s332, 128
        $region44: #{tpu_custom_call.1} parent=39 // pred_fallthru
          _
      $region40: #{tpu_custom_call.1} parent=5 // pred_fallthru
        _
    $region6: #{tpu_custom_call.1} parent=1 // loop_footer
      %s18 = sadd.s32 1, %s14
    $region7: #{tpu_custom_call.1} parent=1 // loop_footer_branch
      %13 = sbr.rel target = $region3
    $region8: #{tpu_custom_call.1} parent=1 // loop_exit
      _
    %338 = vsyncpa [#allocation3], 1
    %s339 = scalar_lea.sflag [#allocation3], 1
    %340 = vsyncpa %s339, 1
    %341 = vsyncpa [#allocation4], 1
    %s342 = scalar_lea.sflag [#allocation4], 1
    %343 = vsyncpa %s342, 1

</llo_original>
